<compile_context>
chip_gen: v7x
topology: tpu7x:2x2x1
jax: 0.10.0
libtpu: 0.0.40
codegen_flags: <defaults>
</compile_context>

<pallas_src>
import math

import jax
import jax.numpy as jnp
from jax.experimental import pallas as pl
from jax.experimental.pallas import tpu as pltpu


# ----------------------------------------------------------------------------
# Kernel 1: standalone small_cell forward (the spec module itself).
#   x (B, I) -> (B, 4H)
# ----------------------------------------------------------------------------
def small_cell_kernel(x_ref, w1_ref, b1_ref, w2_ref, b2_ref, w3_ref, b3_ref, o_ref):
    a = jnp.dot(x_ref[...].astype(jnp.bfloat16), w1_ref[...],
                preferred_element_type=jnp.float32) + b1_ref[...]
    a = jnp.maximum(a, 0.0)
    a = jnp.dot(a.astype(jnp.bfloat16), w2_ref[...],
                preferred_element_type=jnp.float32) + b2_ref[...]
    a = jnp.maximum(a, 0.0)
    a = jnp.dot(a.astype(jnp.bfloat16), w3_ref[...],
                preferred_element_type=jnp.float32) + b3_ref[...]
    o_ref[...] = a.astype(o_ref.dtype)


def small_cell_forward(params, x):
    """params = (w1, b1, w2, b2, w3, b3), weights as (in, out)."""
    w1, b1, w2, b2, w3, b3 = params
    B = x.shape[0]
    out_dim = w3.shape[1]
    vmem = pl.BlockSpec(memory_space=pltpu.MemorySpace.VMEM)
    return pl.pallas_call(
        small_cell_kernel,
        out_shape=jax.ShapeDtypeStruct((B, out_dim), x.dtype),
        in_specs=[vmem] * 7,
        out_specs=vmem,
        compiler_params=pltpu.CompilerParams(vmem_limit_bytes=32 * 1024 * 1024),
    )(x,
      w1.astype(jnp.bfloat16), b1,
      w2.astype(jnp.bfloat16), b2,
      w3.astype(jnp.bfloat16), b3)


# ----------------------------------------------------------------------------
# Kernel 2: fused LSTM-cell sequence kernel (the hot path small_cell lives in).
#   grid = (B // bb, T); weights VMEM-resident, h/c carried in VMEM scratch.
# ----------------------------------------------------------------------------
def lstm_seq_kernel(
    x_ref, h0_ref, c0_ref,
    w1_ref, b1_ref, w2_ref, b2_ref, w3_ref, b3_ref,
    hc_ref,
    h_scr, c_scr,
):
    t = pl.program_id(1)

    @pl.when(t == 0)
    def _():
        h_scr[...] = h0_ref[...].astype(jnp.float32)
        c_scr[...] = c0_ref[...].astype(jnp.float32)

    h = h_scr[...]
    c = c_scr[...]
    H = h_scr.shape[1]

    # Fused layer 1: [x | h] @ blockdiag(W1_ih, W1_hh) + [b1_ih | b1_hh]
    xh = jnp.concatenate([x_ref[0], h], axis=-1).astype(jnp.bfloat16)
    a1 = jnp.dot(xh, w1_ref[...], preferred_element_type=jnp.float32) + b1_ref[...]
    a1 = jnp.maximum(a1, 0.0)

    # Fused layer 2: blockdiag(W2_ih, W2_hh) -> (B, 20H)
    a2 = jnp.dot(a1.astype(jnp.bfloat16), w2_ref[...],
                 preferred_element_type=jnp.float32) + b2_ref[...]
    a2 = jnp.maximum(a2, 0.0)

    # Fused layer 3: concat-K matmul == small_cell_ih(x) + small_cell_hh(h)
    gates = jnp.dot(a2.astype(jnp.bfloat16), w3_ref[...],
                    preferred_element_type=jnp.float32) + b3_ref[...]

    # Gate elementwise math in f32 (safe on v5e which has no bf16 VPU/EUP).
    i_g = jax.nn.sigmoid(gates[:, 0 * H:1 * H])
    f_g = jax.nn.sigmoid(gates[:, 1 * H:2 * H])
    g_g = jnp.tanh(gates[:, 2 * H:3 * H])
    o_g = jax.nn.sigmoid(gates[:, 3 * H:4 * H])

    c_new = f_g * c + i_g * g_g
    h_new = o_g * jnp.tanh(c_new)

    h_scr[...] = h_new
    c_scr[...] = c_new

    # Lane-dense (B, 2H) output slab, written only on the last timestep.
    @pl.when(t == pl.num_programs(1) - 1)
    def _():
        hc_ref[...] = jnp.concatenate([h_new, c_new], axis=-1).astype(hc_ref.dtype)


def lstm_sequence_forward(fused_params, x_seq, h0, c0, *, batch_block=None):
    """Run T LSTM-cell steps in one pallas_call.

    x_seq: (T, B, I); h0, c0: (B, H).  Returns (h_T, c_T), each (B, H).
    """
    w1, b1, w2, b2, w3, b3 = fused_params
    T, B, I = x_seq.shape
    H = h0.shape[-1]
    bb = batch_block or B
    assert B % bb == 0 and (bb == B or bb % 8 == 0), "batch_block must tile B (mult of 8)"
    grid = (B // bb, T)

    const = lambda b, t: (0, 0)  # weights: same block every step -> DMA'd once

    hc = pl.pallas_call(
        lstm_seq_kernel,
        out_shape=jax.ShapeDtypeStruct((B, 2 * H), x_seq.dtype),
        grid_spec=pltpu.PrefetchScalarGridSpec(
            num_scalar_prefetch=0,
            grid=grid,
            in_specs=[
                pl.BlockSpec((1, bb, I), lambda b, t: (t, b, 0)),   # x_t
                pl.BlockSpec((bb, H), lambda b, t: (b, 0)),         # h0
                pl.BlockSpec((bb, H), lambda b, t: (b, 0)),         # c0
                pl.BlockSpec(w1.shape, const),
                pl.BlockSpec(b1.shape, const),
                pl.BlockSpec(w2.shape, const),
                pl.BlockSpec(b2.shape, const),
                pl.BlockSpec(w3.shape, const),
                pl.BlockSpec(b3.shape, const),
            ],
            out_specs=pl.BlockSpec((bb, 2 * H), lambda b, t: (b, 0)),
            scratch_shapes=[
                pltpu.VMEM((bb, H), jnp.float32),   # carried h
                pltpu.VMEM((bb, H), jnp.float32),   # carried c
            ],
        ),
        compiler_params=pltpu.CompilerParams(
            dimension_semantics=("parallel", "arbitrary"),
            vmem_limit_bytes=32 * 1024 * 1024,
        ),
    )(x_seq, h0, c0, w1, b1, w2, b2, w3, b3)

    return hc[:, :H], hc[:, H:]


def lstm_cell_forward(fused_params, x, hidden, *, batch_block=None):
    """Mirrors LSTMCell.forward(input, hidden) -> (hy, cy) for nlayers == 1."""
    h0, c0 = hidden                       # (nlayers=1, B, H)
    hy, cy = lstm_sequence_forward(fused_params, x[None], h0[0], c0[0],
                                   batch_block=batch_block)
    return hy[None], cy[None]


# ----------------------------------------------------------------------------
# Parameter init (PyTorch nn.Linear-style uniform), weights as (in, out).
# ----------------------------------------------------------------------------
def _init_linear(key, in_f, out_f, dtype=jnp.float32):
    kw, kb = jax.random.split(key)
    bound = 1.0 / math.sqrt(in_f)
    w = jax.random.uniform(kw, (in_f, out_f), dtype, -bound, bound)
    b = jax.random.uniform(kb, (1, out_f), dtype, -bound, bound)
    return w, b


def init_small_cell(key, input_size, hidden_size, dtype=jnp.float32):
    k1, k2, k3 = jax.random.split(key, 3)
    w1, b1 = _init_linear(k1, input_size, hidden_size, dtype)
    w2, b2 = _init_linear(k2, hidden_size, 10 * hidden_size, dtype)
    w3, b3 = _init_linear(k3, 10 * hidden_size, 4 * hidden_size, dtype)
    return (w1, b1, w2, b2, w3, b3)


def init_lstm_cell_params(key, input_size, hidden_size, dtype=jnp.float32):
    # Reference LSTMCell forward is only shape-consistent for nlayers == 1.
    k_ih, k_hh = jax.random.split(key)
    return {"w_ih": init_small_cell(k_ih, input_size, hidden_size, dtype),
            "w_hh": init_small_cell(k_hh, hidden_size, hidden_size, dtype)}


def fuse_lstm_params(params, compute_dtype=jnp.bfloat16):
    """Fuse the two small_cell paths into 3 weight matrices (bf16 for the MXU)."""
    w1i, b1i, w2i, b2i, w3i, b3i = params["w_ih"]
    w1h, b1h, w2h, b2h, w3h, b3h = params["w_hh"]
    I, H = w1i.shape
    # layer 1: [x | h] @ blockdiag(W1_ih, W1_hh)        -> (I+H, 2H)
    w1 = jnp.zeros((I + H, 2 * H), jnp.float32)
    w1 = w1.at[:I, :H].set(w1i).at[I:, H:].set(w1h)
    b1 = jnp.concatenate([b1i, b1h], axis=-1)
    # layer 2: blockdiag(W2_ih, W2_hh)                  -> (2H, 20H)
    w2 = jnp.zeros((2 * H, 20 * H), jnp.float32)
    w2 = w2.at[:H, :10 * H].set(w2i).at[H:, 10 * H:].set(w2h)
    b2 = jnp.concatenate([b2i, b2h], axis=-1)
    # layer 3: K-concat (sums the two paths)            -> (20H, 4H)
    w3 = jnp.concatenate([w3i, w3h], axis=0)
    b3 = b3i + b3h
    return (w1.astype(compute_dtype), b1,
            w2.astype(compute_dtype), b2,
            w3.astype(compute_dtype), b3)


# ----------------------------------------------------------------------------
# Pure-JAX references (unfused params, same bf16-matmul / f32-accumulate path).
# ----------------------------------------------------------------------------
def small_cell_ref(params, z):
    w1, b1, w2, b2, w3, b3 = params

    def mm(a, w):
        return jnp.dot(a.astype(jnp.bfloat16), w.astype(jnp.bfloat16),
                       preferred_element_type=jnp.float32)

    a = jnp.maximum(mm(z, w1) + b1, 0.0)
    a = jnp.maximum(mm(a, w2) + b2, 0.0)
    return mm(a, w3) + b3


def lstm_reference_sequence(params, x_seq, h0, c0):
    H = h0.shape[-1]

    def step(carry, x):
        h, c = carry
        gates = small_cell_ref(params["w_ih"], x) + small_cell_ref(params["w_hh"], h)
        i_g = jax.nn.sigmoid(gates[:, :H])
        f_g = jax.nn.sigmoid(gates[:, H:2 * H])
        g_g = jnp.tanh(gates[:, 2 * H:3 * H])
        o_g = jax.nn.sigmoid(gates[:, 3 * H:])
        c_new = f_g * c + i_g * g_g
        h_new = o_g * jnp.tanh(c_new)
        return (h_new, c_new), h_new

    (h_t, c_t), _ = jax.lax.scan(step, (h0, c0), x_seq)
    return h_t, c_t


if __name__ == "__main__":
    input_size = 16
    hidden_size = 32   # 4H = 128 -> lane-aligned gate width
    batch = 16         # multiple of 8 sublanes; split into 2 blocks of 8
    seq = 8

    key = jax.random.PRNGKey(0)
    kp, kx, kh, kc = jax.random.split(key, 4)

    params = init_lstm_cell_params(kp, input_size, hidden_size)
    fused = fuse_lstm_params(params)

    x_seq = jax.random.normal(kx, (seq, batch, input_size), jnp.float32)
    h0 = jax.random.normal(kh, (batch, hidden_size), jnp.float32)
    c0 = jax.random.normal(kc, (batch, hidden_size), jnp.float32)

    # 1) standalone small_cell (the spec module)
    y = jax.block_until_ready(small_cell_forward(params["w_ih"], x_seq[0]))
    y_ref = small_cell_ref(params["w_ih"], x_seq[0])
    assert y.shape == (batch, 4 * hidden_size)
    assert jnp.allclose(y, y_ref, atol=1e-2, rtol=1e-2)

    # 2) fused LSTM sequence (weights VMEM-resident across all timesteps)
    hy, cy = lstm_sequence_forward(fused, x_seq, h0, c0, batch_block=8)
    hy = jax.block_until_ready(hy)
    cy = jax.block_until_ready(cy)
    hy_ref, cy_ref = lstm_reference_sequence(params, x_seq, h0, c0)
    assert jnp.allclose(hy, hy_ref, atol=2e-2, rtol=2e-2)
    assert jnp.allclose(cy, cy_ref, atol=2e-2, rtol=2e-2)

    # 3) single-step LSTMCell.forward API (nlayers == 1)
    hy1, cy1 = lstm_cell_forward(fused, x_seq[0], (h0[None], c0[None]), batch_block=8)
    hy1 = jax.block_until_ready(hy1)
    hy1_ref, cy1_ref = lstm_reference_sequence(params, x_seq[:1], h0, c0)
    assert hy1.shape == (1, batch, hidden_size) and cy1.shape == (1, batch, hidden_size)
    assert jnp.allclose(hy1[0], hy1_ref, atol=2e-2, rtol=2e-2)
    assert jnp.allclose(cy1[0], cy1_ref, atol=2e-2, rtol=2e-2)

    print("KERNEL_OK")
</pallas_src>

<mosaic_0001>
module attributes {stable_mosaic.version = 11 : i64} {
  func.func @small_cell_kernel(%arg0: memref<16x16xf32, #tpu.memory_space<vmem>>, %arg1: memref<16x32xbf16, #tpu.memory_space<vmem>>, %arg2: memref<1x32xf32, #tpu.memory_space<vmem>>, %arg3: memref<32x320xbf16, #tpu.memory_space<vmem>>, %arg4: memref<1x320xf32, #tpu.memory_space<vmem>>, %arg5: memref<320x128xbf16, #tpu.memory_space<vmem>>, %arg6: memref<1x128xf32, #tpu.memory_space<vmem>>, %arg7: memref<16x128xf32, #tpu.memory_space<vmem>>) attributes {dimension_semantics = [], scalar_prefetch = 0 : i64, scratch_operands = 0 : i64, tpu.core_type = #tpu.core_type<tc>} {
    %c0 = arith.constant 0 : index
    %c0_0 = arith.constant 0 : index
    %0 = vector.load %arg0[%c0, %c0_0] : memref<16x16xf32, #tpu.memory_space<vmem>>, vector<16x16xf32>
    %1 = arith.truncf %0 : vector<16x16xf32> to vector<16x16xbf16>
    %c0_1 = arith.constant 0 : index
    %c0_2 = arith.constant 0 : index
    %2 = vector.load %arg1[%c0_1, %c0_2] : memref<16x32xbf16, #tpu.memory_space<vmem>>, vector<16x32xbf16>
    %cst = arith.constant dense<0.000000e+00> : vector<16x32xf32>
    %3 = tpu.matmul %1, %2, %cst {dimension_numbers = #tpu.dot_dimension_numbers<[1], [0], [0], [1], [0, 0, 1, 1], [], []>} : vector<16x16xbf16>, vector<16x32xbf16>, vector<16x32xf32> -> vector<16x32xf32>
    %c0_3 = arith.constant 0 : index
    %c0_4 = arith.constant 0 : index
    %4 = vector.load %arg2[%c0_3, %c0_4] : memref<1x32xf32, #tpu.memory_space<vmem>>, vector<1x32xf32>
    %5 = vector.broadcast %4 : vector<1x32xf32> to vector<16x32xf32>
    %6 = arith.addf %3, %5 : vector<16x32xf32>
    %cst_5 = arith.constant 0.000000e+00 : f32
    %7 = vector.broadcast %cst_5 : f32 to vector<16x32xf32>
    %8 = arith.maximumf %6, %7 : vector<16x32xf32>
    %9 = arith.truncf %8 : vector<16x32xf32> to vector<16x32xbf16>
    %c0_6 = arith.constant 0 : index
    %c0_7 = arith.constant 0 : index
    %10 = vector.load %arg3[%c0_6, %c0_7] : memref<32x320xbf16, #tpu.memory_space<vmem>>, vector<32x320xbf16>
    %cst_8 = arith.constant dense<0.000000e+00> : vector<16x320xf32>
    %11 = tpu.matmul %9, %10, %cst_8 {dimension_numbers = #tpu.dot_dimension_numbers<[1], [0], [0], [1], [0, 0, 1, 1], [], []>} : vector<16x32xbf16>, vector<32x320xbf16>, vector<16x320xf32> -> vector<16x320xf32>
    %c0_9 = arith.constant 0 : index
    %c0_10 = arith.constant 0 : index
    %12 = vector.load %arg4[%c0_9, %c0_10] : memref<1x320xf32, #tpu.memory_space<vmem>>, vector<1x320xf32>
    %13 = vector.broadcast %12 : vector<1x320xf32> to vector<16x320xf32>
    %14 = arith.addf %11, %13 : vector<16x320xf32>
    %cst_11 = arith.constant 0.000000e+00 : f32
    %15 = vector.broadcast %cst_11 : f32 to vector<16x320xf32>
    %16 = arith.maximumf %14, %15 : vector<16x320xf32>
    %17 = arith.truncf %16 : vector<16x320xf32> to vector<16x320xbf16>
    %c0_12 = arith.constant 0 : index
    %c0_13 = arith.constant 0 : index
    %18 = vector.load %arg5[%c0_12, %c0_13] : memref<320x128xbf16, #tpu.memory_space<vmem>>, vector<320x128xbf16>
    %cst_14 = arith.constant dense<0.000000e+00> : vector<16x128xf32>
    %19 = tpu.matmul %17, %18, %cst_14 {dimension_numbers = #tpu.dot_dimension_numbers<[1], [0], [0], [1], [0, 0, 1, 1], [], []>} : vector<16x320xbf16>, vector<320x128xbf16>, vector<16x128xf32> -> vector<16x128xf32>
    %c0_15 = arith.constant 0 : index
    %c0_16 = arith.constant 0 : index
    %20 = vector.load %arg6[%c0_15, %c0_16] : memref<1x128xf32, #tpu.memory_space<vmem>>, vector<1x128xf32>
    %21 = vector.broadcast %20 : vector<1x128xf32> to vector<16x128xf32>
    %22 = arith.addf %19, %21 : vector<16x128xf32>
    %c0_17 = arith.constant 0 : index
    %c0_18 = arith.constant 0 : index
    %23 = vector.load %arg7[%c0_17, %c0_18] : memref<16x128xf32, #tpu.memory_space<vmem>>, vector<16x128xf32>
    tpu.vector_store %arg7[%c0_17, %c0_18], %22 {strides = array<i32>} : memref<16x128xf32, #tpu.memory_space<vmem>>, vector<16x128xf32>,
    return
  }
}

</mosaic_0001>

<llo_original>
// kernel: tpu_custom_call.1
$region0: #{tpu_custom_call.1}
  #allocation0 [shape = 'u32[]', space=smem, size = 0x4, offset = 0x4, fixed_abs, tag = 'smem constant byte address 0x4 - core index']
  #allocation1 [shape = 'u32[144,128]{1,0:T(1,128)}', space=vmem, size = 0x12000, scoped, tag = 'internal scratch']
  %s0 = inlined_call_operand.hbm [shape: f32[16,16], index: 0, kind: input, shape index: {}]
  %s1 = inlined_call_operand.hbm [shape: bf16[16,32], index: 1, kind: input, shape index: {}]
  %s2 = inlined_call_operand.vmem [shape: f32[1,32], index: 2, kind: input, shape index: {}]
  %s3 = inlined_call_operand.hbm [shape: bf16[32,320], index: 3, kind: input, shape index: {}]
  %s4 = inlined_call_operand.vmem [shape: f32[1,320], index: 4, kind: input, shape index: {}]
  %s5 = inlined_call_operand.hbm [shape: bf16[320,128], index: 5, kind: input, shape index: {}]
  %s6 = inlined_call_operand.vmem [shape: f32[1,128], index: 6, kind: input, shape index: {}]
  %s7 = inlined_call_operand.hbm [shape: f32[16,128], index: 7, kind: output, shape index: {}]
  %s8 = sld [smem:[#allocation0]]
  $region54: #{tpu_custom_call.1} parent=0
    _
  %s10 = ssub.s32 1, %s8
  %s11 = scalar_select 0, %s10, %s8
  $region1: #{tpu_custom_call.1} parent=0
    #allocation2 [shape = 'u8[8192]{0}', space=vmem, size = 0x2000, scoped, tag = 'input window, operand 0, single buffered']
    #allocation3 [shape = 's32[1]{0}', space=sflag, size = 0x4, scoped, tag = 'scoped memory for tpu_custom_call.1']
    #allocation4 [shape = 's32[1]{0}', space=sflag, size = 0x4, scoped, tag = 'scoped memory for tpu_custom_call.1']
    #allocation5 [shape = 'u8[4096]{0}', space=vmem, size = 0x1000, scoped, tag = 'input window, operand 1, single buffered']
    #allocation6 [shape = 's32[1]{0}', space=sflag, size = 0x4, scoped, tag = 'scoped memory for tpu_custom_call.1']
    #allocation7 [shape = 'u8[24576]{0}', space=vmem, size = 0x6000, scoped, tag = 'input window, operand 3, single buffered']
    #allocation8 [shape = 'u8[81920]{0}', space=vmem, size = 0x14000, scoped, tag = 'input window, operand 5, single buffered']
    #allocation9 [shape = 's32[1]{0}', space=sflag, size = 0x4, scoped, tag = 'scoped memory for tpu_custom_call.1']
    #allocation10 [shape = 'u8[8192]{0}', space=vmem, size = 0x2000, scoped, tag = 'output window, operand 0, single buffered']
    %12 = vsyncpa [#allocation3], 0
    %13 = vsyncpa [#allocation6], 0
    %14 = vsyncpa [#allocation9], 0
    %15 = vsyncpa [#allocation4], 0
    // Predicated region
    $region2: #{tpu_custom_call.1} parent=1 // pred_check
      _
    $region3: #{tpu_custom_call.1} parent=1 // pred_check_branch
      %17 = sbr.rel (0) target = $region5
    $region4: #{tpu_custom_call.1} parent=1 // pred_region
      %s19 = ssub.s32 256, 256
      %20 = vsyncadd [#allocation3], %s19
      %s21 = sshll.u32 [#allocation2], 4
      %s22 = int_to_ptr.vmem [resolvable:$true] %s21
      %27 = dma.hbm_to_vmem [thread:$0]  %s0, 256, %s22, [#allocation3], 128, 128, 8
    $region5: #{tpu_custom_call.1} parent=1 // pred_fallthru
      _
    // Predicated region
    $region6: #{tpu_custom_call.1} parent=1 // pred_check
      _
    $region7: #{tpu_custom_call.1} parent=1 // pred_check_branch
      %29 = sbr.rel (0) target = $region9
    $region8: #{tpu_custom_call.1} parent=1 // pred_region
      %s31 = ssub.s32 128, 128
      %32 = vsyncadd [#allocation6], %s31
      %s33 = sshll.u32 [#allocation5], 4
      %s34 = int_to_ptr.vmem [resolvable:$true] %s33
      %39 = dma.hbm_to_vmem [thread:$0]  %s1, 128, %s34, [#allocation6], 64, 64, 4
    $region9: #{tpu_custom_call.1} parent=1 // pred_fallthru
      _
    // Predicated region
    $region10: #{tpu_custom_call.1} parent=1 // pred_check
      _
    $region11: #{tpu_custom_call.1} parent=1 // pred_check_branch
      %41 = sbr.rel (0) target = $region13
    $region12: #{tpu_custom_call.1} parent=1 // pred_region
      _
    $region13: #{tpu_custom_call.1} parent=1 // pred_fallthru
      _
    // Predicated region
    $region14: #{tpu_custom_call.1} parent=1 // pred_check
      _
    $region15: #{tpu_custom_call.1} parent=1 // pred_check_branch
      %43 = sbr.rel (0) target = $region17
    $region16: #{tpu_custom_call.1} parent=1 // pred_region
      %s45 = ssub.s32 768, 768
      %46 = vsyncadd [#allocation6], %s45
      %s47 = sshll.u32 [#allocation7], 4
      %s48 = int_to_ptr.vmem [resolvable:$true] %s47
      %53 = dma.hbm_to_vmem [thread:$0]  %s3, 768, %s48, [#allocation6], 192, 192, 12
    $region17: #{tpu_custom_call.1} parent=1 // pred_fallthru
      _
    // Predicated region
    $region18: #{tpu_custom_call.1} parent=1 // pred_check
      _
    $region19: #{tpu_custom_call.1} parent=1 // pred_check_branch
      %55 = sbr.rel (0) target = $region21
    $region20: #{tpu_custom_call.1} parent=1 // pred_region
      _
    $region21: #{tpu_custom_call.1} parent=1 // pred_fallthru
      _
    // Predicated region
    $region22: #{tpu_custom_call.1} parent=1 // pred_check
      _
    $region23: #{tpu_custom_call.1} parent=1 // pred_check_branch
      %57 = sbr.rel (0) target = $region25
    $region24: #{tpu_custom_call.1} parent=1 // pred_region
      %s59 = ssub.s32 2560, 2560
      %60 = vsyncadd [#allocation9], %s59
      %s61 = sshll.u32 [#allocation8], 4
      %s62 = int_to_ptr.vmem [resolvable:$true] %s61
      %67 = dma.hbm_to_vmem [thread:$0]  %s5, 2560, %s62, [#allocation9], 64, 64, 4
    $region25: #{tpu_custom_call.1} parent=1 // pred_fallthru
      _
    // Predicated region
    $region26: #{tpu_custom_call.1} parent=1 // pred_check
      _
    $region27: #{tpu_custom_call.1} parent=1 // pred_check_branch
      %69 = sbr.rel (0) target = $region29
    $region28: #{tpu_custom_call.1} parent=1 // pred_region
      _
    $region29: #{tpu_custom_call.1} parent=1 // pred_fallthru
      _
    // Predicated region
    $region30: #{tpu_custom_call.1} parent=1 // pred_check
      _
    $region31: #{tpu_custom_call.1} parent=1 // pred_check_branch
      %71 = sbr.rel (0) target = $region33
    $region32: #{tpu_custom_call.1} parent=1 // pred_region
      %72 = dma.done [#allocation3], 256
    $region33: #{tpu_custom_call.1} parent=1 // pred_fallthru
      _
    // Predicated region
    $region34: #{tpu_custom_call.1} parent=1 // pred_check
      _
    $region35: #{tpu_custom_call.1} parent=1 // pred_check_branch
      %74 = sbr.rel (0) target = $region37
    $region36: #{tpu_custom_call.1} parent=1 // pred_region
      %75 = dma.done [#allocation6], 128
    $region37: #{tpu_custom_call.1} parent=1 // pred_fallthru
      _
    // Predicated region
    $region38: #{tpu_custom_call.1} parent=1 // pred_check
      _
    $region39: #{tpu_custom_call.1} parent=1 // pred_check_branch
      %77 = sbr.rel (0) target = $region41
    $region40: #{tpu_custom_call.1} parent=1 // pred_region
      %78 = dma.done [#allocation6], 768
    $region41: #{tpu_custom_call.1} parent=1 // pred_fallthru
      _
    // Predicated region
    $region42: #{tpu_custom_call.1} parent=1 // pred_check
      _
    $region43: #{tpu_custom_call.1} parent=1 // pred_check_branch
      %80 = sbr.rel (0) target = $region45
    $region44: #{tpu_custom_call.1} parent=1 // pred_region
      %81 = dma.done [#allocation9], 2560
    $region45: #{tpu_custom_call.1} parent=1 // pred_fallthru
      _
    %v83 = vld [vmem:[#allocation2] sm:$0xff]
    %v84 = vld [vmem:[#allocation2 + $0x8] sm:$0xff]
    %v85 = vpack.c.bf16 %v84, %v83
    %v86 = vld [vmem:[#allocation5] sm:$0xf]
    %v87 = vld [vmem:[#allocation5 + $0x4] sm:$0xf]
    %v88 = vld [vmem:[%s2] sm:$0x1]
    %v90 = vlaneseq
    %v91 = vshrl.u32 %v90, 7
    %v92 = vsub.s32 0, %v91
    %v93 = vrot.slane %v88, %v92
    %v97 = vunpack.c.l.b16 %v86
    %v98 = vunpack.c.l.b16 %v87
    %v99 = vpack.c.b16 %v98, %v97
    %vm101 = vcmask 130048
    %v103 = vsel %vm101, %v85, 0
    %105 = vmatprep.subr.bf16.mxu0 0
    %106 = vmatpush1.bf16.msra.mxu0 %v99
    %107 = vmatprep.subr.bf16.mxu0 0
    %108 = vmatpush1.bf16.msra.mxu0 0
    %109 = vmatprep.subr.bf16.mxu0 0
    %110 = vmatpush1.bf16.msra.mxu0 0
    %111 = vmatprep.subr.bf16.mxu0 0
    %112 = vmatpush1.bf16.msra.mxu0 0
    %113 = vmatprep.subr.bf16.mxu0 0
    %114 = vmatpush1.bf16.msra.mxu0 0
    %115 = vmatprep.subr.bf16.mxu0 0
    %116 = vmatpush1.bf16.msra.mxu0 0
    %117 = vmatprep.subr.bf16.mxu0 0
    %118 = vmatpush1.bf16.msra.mxu0 0
    %119 = vmatprep.subr.bf16.mxu0 0
    %120 = vmatpush1.bf16.msra.mxu0 0
    %121 = vmatprep.subr.bf16.mxu0 0
    %122 = vmatpush1.bf16.msra.mxu0 0
    %123 = vmatprep.subr.bf16.mxu0 0
    %124 = vmatpush1.bf16.msra.mxu0 0
    %125 = vmatprep.subr.bf16.mxu0 0
    %126 = vmatpush1.bf16.msra.mxu0 0
    %127 = vmatprep.subr.bf16.mxu0 0
    %128 = vmatpush1.bf16.msra.mxu0 0
    %129 = vmatprep.subr.bf16.mxu0 0
    %130 = vmatpush1.bf16.msra.mxu0 0
    %131 = vmatprep.subr.bf16.mxu0 0
    %132 = vmatpush1.bf16.msra.mxu0 0
    %133 = vmatprep.subr.bf16.mxu0 0
    %134 = vmatpush1.bf16.msra.mxu0 0
    %135 = vmatprep.subr.bf16.mxu0 0
    %136 = vmatpush1.bf16.msra.mxu0 0
    %137 = vmatprep.mubr.bf16.mxu0 0
    %138 = vmatmul.mubr.bf16.gmra.mrb[0].mxu0 %v103
    %v139 = vpop.f32.mrb[0].mxu0
    %v140 = vadd.f32 %v93, %v139
    %v141 = vpop.f32.mrb[0].mxu0
    %v142 = vpop.f32.mrb[0].mxu0
    %v143 = vadd.f32 %v93, %v142
    %v144 = vpop.f32.mrb[0].mxu0
    %145 = vdwg.mxu0
    %v146 = vmax.f32 %v140, 0.0
    %v147 = vmax.f32 %v143, 0.0
    %v148 = vpack.c.bf16 %v147, %v146
    %v149 = vld [vmem:[#allocation7] sm:$0xff]
    %v150 = vld [vmem:[#allocation7 + $0x8] sm:$0xf]
    %v151 = vld [vmem:[#allocation7 + $0xc] sm:$0xff]
    %v152 = vld [vmem:[#allocation7 + $0x14] sm:$0xf]
    %v153 = vld [vmem:[#allocation7 + $0x18] sm:$0xff]
    %v154 = vld [vmem:[#allocation7 + $0x20] sm:$0xf]
    %v155 = vld [vmem:[#allocation7 + $0x24] sm:$0xff]
    %v156 = vld [vmem:[#allocation7 + $0x2c] sm:$0xf]
    %v157 = vld [vmem:[%s4] sm:$0x7]
    %v159 = vlaneseq
    %v160 = vshrl.u32 %v159, 7
    %v161 = vsub.s32 0, %v160
    %v162 = vrot.slane %v157, %v161
    %v163 = vlaneseq
    %v164 = vshrl.u32 %v163, 7
    %v165 = vsub.s32 1, %v164
    %v166 = vrot.slane %v157, %v165
    %v167 = vlaneseq
    %v168 = vshrl.u32 %v167, 7
    %v169 = vsub.s32 2, %v168
    %v170 = vrot.slane %v157, %v169
    %v182 = vunpack.c.l.b16 %v149
    %v183 = vunpack.c.h.b16 %v149
    %v184 = vunpack.c.l.b16 %v150
    %v185 = vunpack.c.l.b16 %v151
    %v186 = vunpack.c.h.b16 %v151
    %v187 = vunpack.c.l.b16 %v152
    %v188 = vunpack.c.l.b16 %v153
    %v189 = vunpack.c.h.b16 %v153
    %v190 = vunpack.c.l.b16 %v154
    %v191 = vunpack.c.l.b16 %v155
    %v192 = vunpack.c.h.b16 %v155
    %v193 = vunpack.c.l.b16 %v156
    %v194 = vpack.c.b16 %v185, %v182
    %v195 = vpack.c.b16 %v186, %v183
    %v196 = vpack.c.b16 %v187, %v184
    %v197 = vpack.c.b16 %v191, %v188
    %v198 = vpack.c.b16 %v192, %v189
    %v199 = vpack.c.b16 %v193, %v190
    %vm206 = vcmask 261120
    %v208 = vsel %vm206, %v148, 0
    %210 = vmatprep.subr.bf16.mxu0 %v195
    %211 = vmatpush1.bf16.msra.mxu0 %v194
    %212 = vmatprep.subr.bf16.mxu0 %v198
    %213 = vmatpush1.bf16.msra.mxu0 %v197
    %214 = vmatprep.subr.bf16.mxu0 0
    %215 = vmatpush1.bf16.msra.mxu0 0
    %216 = vmatprep.subr.bf16.mxu0 0
    %217 = vmatpush1.bf16.msra.mxu0 0
    %218 = vmatprep.subr.bf16.mxu0 0
    %219 = vmatpush1.bf16.msra.mxu0 0
    %220 = vmatprep.subr.bf16.mxu0 0
    %221 = vmatpush1.bf16.msra.mxu0 0
    %222 = vmatprep.subr.bf16.mxu0 0
    %223 = vmatpush1.bf16.msra.mxu0 0
    %224 = vmatprep.subr.bf16.mxu0 0
    %225 = vmatpush1.bf16.msra.mxu0 0
    %226 = vmatprep.subr.bf16.mxu0 0
    %227 = vmatpush1.bf16.msra.mxu0 0
    %228 = vmatprep.subr.bf16.mxu0 0
    %229 = vmatpush1.bf16.msra.mxu0 0
    %230 = vmatprep.subr.bf16.mxu0 0
    %231 = vmatpush1.bf16.msra.mxu0 0
    %232 = vmatprep.subr.bf16.mxu0 0
    %233 = vmatpush1.bf16.msra.mxu0 0
    %234 = vmatprep.subr.bf16.mxu0 0
    %235 = vmatpush1.bf16.msra.mxu0 0
    %236 = vmatprep.subr.bf16.mxu0 0
    %237 = vmatpush1.bf16.msra.mxu0 0
    %238 = vmatprep.subr.bf16.mxu0 0
    %239 = vmatpush1.bf16.msra.mxu0 0
    %240 = vmatprep.subr.bf16.mxu0 0
    %241 = vmatpush1.bf16.msra.mxu0 0
    %242 = vmatprep.mubr.bf16.mxu0 0
    %243 = vmatmul.mubr.bf16.gmra.mrb[0].mxu0 %v208
    %v244 = vpop.f32.mrb[0].mxu0
    %v245 = vadd.f32 %v162, %v244
    %v246 = vpop.f32.mrb[0].mxu0
    %v247 = vadd.f32 %v166, %v246
    %v248 = vpop.f32.mrb[0].mxu0
    %v249 = vadd.f32 %v162, %v248
    %v250 = vpop.f32.mrb[0].mxu0
    %v251 = vadd.f32 %v166, %v250
    %252 = vdwg.mxu0
    %253 = vmatprep.subr.bf16.mxu0 0
    %254 = vmatpush1.bf16.msra.mxu0 %v196
    %255 = vmatprep.subr.bf16.mxu0 0
    %256 = vmatpush1.bf16.msra.mxu0 %v199
    %257 = vmatprep.subr.bf16.mxu0 0
    %258 = vmatpush1.bf16.msra.mxu0 0
    %259 = vmatprep.subr.bf16.mxu0 0
    %260 = vmatpush1.bf16.msra.mxu0 0
    %261 = vmatprep.subr.bf16.mxu0 0
    %262 = vmatpush1.bf16.msra.mxu0 0
    %263 = vmatprep.subr.bf16.mxu0 0
    %264 = vmatpush1.bf16.msra.mxu0 0
    %265 = vmatprep.subr.bf16.mxu0 0
    %266 = vmatpush1.bf16.msra.mxu0 0
    %267 = vmatprep.subr.bf16.mxu0 0
    %268 = vmatpush1.bf16.msra.mxu0 0
    %269 = vmatprep.subr.bf16.mxu0 0
    %270 = vmatpush1.bf16.msra.mxu0 0
    %271 = vmatprep.subr.bf16.mxu0 0
    %272 = vmatpush1.bf16.msra.mxu0 0
    %273 = vmatprep.subr.bf16.mxu0 0
    %274 = vmatpush1.bf16.msra.mxu0 0
    %275 = vmatprep.subr.bf16.mxu0 0
    %276 = vmatpush1.bf16.msra.mxu0 0
    %277 = vmatprep.subr.bf16.mxu0 0
    %278 = vmatpush1.bf16.msra.mxu0 0
    %279 = vmatprep.subr.bf16.mxu0 0
    %280 = vmatpush1.bf16.msra.mxu0 0
    %281 = vmatprep.subr.bf16.mxu0 0
    %282 = vmatpush1.bf16.msra.mxu0 0
    %283 = vmatprep.subr.bf16.mxu0 0
    %284 = vmatpush1.bf16.msra.mxu0 0
    %285 = vmatprep.mubr.bf16.mxu0 0
    %286 = vmatmul.mubr.bf16.gmra.mrb[0].mxu0 %v208
    %v287 = vpop.f32.mrb[0].mxu0
    %v288 = vadd.f32 %v170, %v287
    %v289 = vpop.f32.mrb[0].mxu0
    %v290 = vpop.f32.mrb[0].mxu0
    %v291 = vadd.f32 %v170, %v290
    %v292 = vpop.f32.mrb[0].mxu0
    %293 = vdwg.mxu0
    %v294 = vmax.f32 %v245, 0.0
    %v295 = vmax.f32 %v247, 0.0
    %v296 = vmax.f32 %v288, 0.0
    %v297 = vmax.f32 %v249, 0.0
    %v298 = vmax.f32 %v251, 0.0
    %v299 = vmax.f32 %v291, 0.0
    %v300 = vpack.c.bf16 %v297, %v294
    %v301 = vpack.c.bf16 %v298, %v295
    %v302 = vpack.c.bf16 %v299, %v296
    %v303 = vld [vmem:[#allocation8] sm:$0xf]
    %v304 = vld [vmem:[#allocation8 + $0x4] sm:$0xf]
    %v305 = vld [vmem:[#allocation8 + $0x8] sm:$0xf]
    %v306 = vld [vmem:[#allocation8 + $0xc] sm:$0xf]
    %v307 = vld [vmem:[#allocation8 + $0x10] sm:$0xf]
    %v308 = vld [vmem:[#allocation8 + $0x14] sm:$0xf]
    %v309 = vld [vmem:[#allocation8 + $0x18] sm:$0xf]
    %v310 = vld [vmem:[#allocation8 + $0x1c] sm:$0xf]
    %v311 = vld [vmem:[#allocation8 + $0x20] sm:$0xf]
    %v312 = vld [vmem:[#allocation8 + $0x24] sm:$0xf]
    %v313 = vld [vmem:[#allocation8 + $0x28] sm:$0xf]
    %v314 = vld [vmem:[#allocation8 + $0x2c] sm:$0xf]
    %v315 = vld [vmem:[#allocation8 + $0x30] sm:$0xf]
    %v316 = vld [vmem:[#allocation8 + $0x34] sm:$0xf]
    %v317 = vld [vmem:[#allocation8 + $0x38] sm:$0xf]
    %v318 = vld [vmem:[#allocation8 + $0x3c] sm:$0xf]
    %v319 = vld [vmem:[#allocation8 + $0x40] sm:$0xf]
    %v320 = vld [vmem:[#allocation8 + $0x44] sm:$0xf]
    %v321 = vld [vmem:[#allocation8 + $0x48] sm:$0xf]
    %v322 = vld [vmem:[#allocation8 + $0x4c] sm:$0xf]
    %v323 = vld [vmem:[#allocation8 + $0x50] sm:$0xf]
    %v324 = vld [vmem:[#allocation8 + $0x54] sm:$0xf]
    %v325 = vld [vmem:[#allocation8 + $0x58] sm:$0xf]
    %v326 = vld [vmem:[#allocation8 + $0x5c] sm:$0xf]
    %v327 = vld [vmem:[#allocation8 + $0x60] sm:$0xf]
    %v328 = vld [vmem:[#allocation8 + $0x64] sm:$0xf]
    %v329 = vld [vmem:[#allocation8 + $0x68] sm:$0xf]
    %v330 = vld [vmem:[#allocation8 + $0x6c] sm:$0xf]
    %v331 = vld [vmem:[#allocation8 + $0x70] sm:$0xf]
    %v332 = vld [vmem:[#allocation8 + $0x74] sm:$0xf]
    %v333 = vld [vmem:[#allocation8 + $0x78] sm:$0xf]
    %v334 = vld [vmem:[#allocation8 + $0x7c] sm:$0xf]
    %v335 = vld [vmem:[#allocation8 + $0x80] sm:$0xf]
    %v336 = vld [vmem:[#allocation8 + $0x84] sm:$0xf]
    %v337 = vld [vmem:[#allocation8 + $0x88] sm:$0xf]
    %v338 = vld [vmem:[#allocation8 + $0x8c] sm:$0xf]
    %v339 = vld [vmem:[#allocation8 + $0x90] sm:$0xf]
    %v340 = vld [vmem:[#allocation8 + $0x94] sm:$0xf]
    %v341 = vld [vmem:[#allocation8 + $0x98] sm:$0xf]
    %v342 = vld [vmem:[#allocation8 + $0x9c] sm:$0xf]
    %v343 = vld [vmem:[%s6] sm:$0x1]
    %v345 = vlaneseq
    %v346 = vshrl.u32 %v345, 7
    %v347 = vsub.s32 0, %v346
    %v348 = vrot.slane %v343, %v347
    %v390 = vunpack.c.l.b16 %v303
    %v391 = vunpack.c.l.b16 %v304
    %v392 = vunpack.c.l.b16 %v305
    %v393 = vunpack.c.l.b16 %v306
    %v394 = vunpack.c.l.b16 %v307
    %v395 = vunpack.c.l.b16 %v308
    %v396 = vunpack.c.l.b16 %v309
    %v397 = vunpack.c.l.b16 %v310
    %v398 = vunpack.c.l.b16 %v311
    %v399 = vunpack.c.l.b16 %v312
    %v400 = vunpack.c.l.b16 %v313
    %v401 = vunpack.c.l.b16 %v314
    %v402 = vunpack.c.l.b16 %v315
    %v403 = vunpack.c.l.b16 %v316
    %v404 = vunpack.c.l.b16 %v317
    %v405 = vunpack.c.l.b16 %v318
    %v406 = vunpack.c.l.b16 %v319
    %v407 = vunpack.c.l.b16 %v320
    %v408 = vunpack.c.l.b16 %v321
    %v409 = vunpack.c.l.b16 %v322
    %v410 = vunpack.c.l.b16 %v323
    %v411 = vunpack.c.l.b16 %v324
    %v412 = vunpack.c.l.b16 %v325
    %v413 = vunpack.c.l.b16 %v326
    %v414 = vunpack.c.l.b16 %v327
    %v415 = vunpack.c.l.b16 %v328
    %v416 = vunpack.c.l.b16 %v329
    %v417 = vunpack.c.l.b16 %v330
    %v418 = vunpack.c.l.b16 %v331
    %v419 = vunpack.c.l.b16 %v332
    %v420 = vunpack.c.l.b16 %v333
    %v421 = vunpack.c.l.b16 %v334
    %v422 = vunpack.c.l.b16 %v335
    %v423 = vunpack.c.l.b16 %v336
    %v424 = vunpack.c.l.b16 %v337
    %v425 = vunpack.c.l.b16 %v338
    %v426 = vunpack.c.l.b16 %v339
    %v427 = vunpack.c.l.b16 %v340
    %v428 = vunpack.c.l.b16 %v341
    %v429 = vunpack.c.l.b16 %v342
    %v430 = vpack.c.b16 %v391, %v390
    %v431 = vpack.c.b16 %v393, %v392
    %v432 = vpack.c.b16 %v395, %v394
    %v433 = vpack.c.b16 %v397, %v396
    %v434 = vpack.c.b16 %v399, %v398
    %v435 = vpack.c.b16 %v401, %v400
    %v436 = vpack.c.b16 %v403, %v402
    %v437 = vpack.c.b16 %v405, %v404
    %v438 = vpack.c.b16 %v407, %v406
    %v439 = vpack.c.b16 %v409, %v408
    %v440 = vpack.c.b16 %v411, %v410
    %v441 = vpack.c.b16 %v413, %v412
    %v442 = vpack.c.b16 %v415, %v414
    %v443 = vpack.c.b16 %v417, %v416
    %v444 = vpack.c.b16 %v419, %v418
    %v445 = vpack.c.b16 %v421, %v420
    %v446 = vpack.c.b16 %v423, %v422
    %v447 = vpack.c.b16 %v425, %v424
    %v448 = vpack.c.b16 %v427, %v426
    %v449 = vpack.c.b16 %v429, %v428
    %vm470 = vcmask 523264
    %v472 = vsel %vm470, %v302, 0
    %474 = vmatprep.subr.bf16.mxu0 0
    %475 = vmatpush1.bf16.msra.mxu0 %v430
    %476 = vmatprep.subr.bf16.mxu0 0
    %477 = vmatpush1.bf16.msra.mxu0 %v431
    %478 = vmatprep.subr.bf16.mxu0 0
    %479 = vmatpush1.bf16.msra.mxu0 %v432
    %480 = vmatprep.subr.bf16.mxu0 0
    %481 = vmatpush1.bf16.msra.mxu0 %v433
    %482 = vmatprep.subr.bf16.mxu0 0
    %483 = vmatpush1.bf16.msra.mxu0 %v434
    %484 = vmatprep.subr.bf16.mxu0 0
    %485 = vmatpush1.bf16.msra.mxu0 %v435
    %486 = vmatprep.subr.bf16.mxu0 0
    %487 = vmatpush1.bf16.msra.mxu0 %v436
    %488 = vmatprep.subr.bf16.mxu0 0
    %489 = vmatpush1.bf16.msra.mxu0 %v437
    %490 = vmatprep.subr.bf16.mxu0 0
    %491 = vmatpush1.bf16.msra.mxu0 %v438
    %492 = vmatprep.subr.bf16.mxu0 0
    %493 = vmatpush1.bf16.msra.mxu0 %v439
    %494 = vmatprep.subr.bf16.mxu0 0
    %495 = vmatpush1.bf16.msra.mxu0 %v440
    %496 = vmatprep.subr.bf16.mxu0 0
    %497 = vmatpush1.bf16.msra.mxu0 %v441
    %498 = vmatprep.subr.bf16.mxu0 0
    %499 = vmatpush1.bf16.msra.mxu0 %v442
    %500 = vmatprep.subr.bf16.mxu0 0
    %501 = vmatpush1.bf16.msra.mxu0 %v443
    %502 = vmatprep.subr.bf16.mxu0 0
    %503 = vmatpush1.bf16.msra.mxu0 %v444
    %504 = vmatprep.subr.bf16.mxu0 0
    %505 = vmatpush1.bf16.msra.mxu0 %v445
    %506 = vmatprep.mubr.bf16.mxu0 %v301
    %507 = vmatmul.mubr.bf16.gmra.mrb[0].mxu0 %v300
    %v508 = vpop.f32.mrb[0].mxu0
    %v509 = vadd.f32 %v348, %v508
    %v510 = vpop.f32.mrb[0].mxu0
    %v511 = vpop.f32.mrb[0].mxu0
    %v512 = vadd.f32 %v348, %v511
    %v513 = vpop.f32.mrb[0].mxu0
    %514 = vdwg.mxu0
    %515 = vmatprep.subr.bf16.mxu0 0
    %516 = vmatpush1.bf16.msra.mxu0 %v446
    %517 = vmatprep.subr.bf16.mxu0 0
    %518 = vmatpush1.bf16.msra.mxu0 %v447
    %519 = vmatprep.subr.bf16.mxu0 0
    %520 = vmatpush1.bf16.msra.mxu0 %v448
    %521 = vmatprep.subr.bf16.mxu0 0
    %522 = vmatpush1.bf16.msra.mxu0 %v449
    %523 = vmatprep.subr.bf16.mxu0 0
    %524 = vmatpush1.bf16.msra.mxu0 0
    %525 = vmatprep.subr.bf16.mxu0 0
    %526 = vmatpush1.bf16.msra.mxu0 0
    %527 = vmatprep.subr.bf16.mxu0 0
    %528 = vmatpush1.bf16.msra.mxu0 0
    %529 = vmatprep.subr.bf16.mxu0 0
    %530 = vmatpush1.bf16.msra.mxu0 0
    %531 = vmatprep.subr.bf16.mxu0 0
    %532 = vmatpush1.bf16.msra.mxu0 0
    %533 = vmatprep.subr.bf16.mxu0 0
    %534 = vmatpush1.bf16.msra.mxu0 0
    %535 = vmatprep.subr.bf16.mxu0 0
    %536 = vmatpush1.bf16.msra.mxu0 0
    %537 = vmatprep.subr.bf16.mxu0 0
    %538 = vmatpush1.bf16.msra.mxu0 0
    %539 = vmatprep.subr.bf16.mxu0 0
    %540 = vmatpush1.bf16.msra.mxu0 0
    %541 = vmatprep.subr.bf16.mxu0 0
    %542 = vmatpush1.bf16.msra.mxu0 0
    %543 = vmatprep.subr.bf16.mxu0 0
    %544 = vmatpush1.bf16.msra.mxu0 0
    %545 = vmatprep.subr.bf16.mxu0 0
    %546 = vmatpush1.bf16.msra.mxu0 0
    %547 = vmatprep.mubr.bf16.mxu0 0
    %548 = vmatmul.mubr.bf16.gmra.mrb[0].mxu0 %v472
    %v549 = vpop.f32.mrb[0].mxu0
    %v550 = vadd.f32 %v509, %v549
    %v551 = vpop.f32.mrb[0].mxu0
    %v552 = vpop.f32.mrb[0].mxu0
    %v553 = vadd.f32 %v512, %v552
    %v554 = vpop.f32.mrb[0].mxu0
    %555 = vdwg.mxu0
    %556 = vst [vmem:[#allocation10] sm:$0xff] %v550
    %557 = vst [vmem:[#allocation10 + $0x8] sm:$0xff] %v553
    // Predicated region
    $region46: #{tpu_custom_call.1} parent=1 // pred_check
      _
    $region47: #{tpu_custom_call.1} parent=1 // pred_check_branch
      %559 = sbr.rel (0) target = $region49
    $region48: #{tpu_custom_call.1} parent=1 // pred_region
      %s561 = ssub.s32 256, 256
      %562 = vsyncadd [#allocation4], %s561
      %s563 = sshll.u32 [#allocation10], 4
      %s564 = int_to_ptr.vmem [resolvable:$true] %s563
      %569 = dma.vmem_to_hbm [thread:$0]  %s564, 256, %s7, [#allocation4], 128, 128, 8
    $region49: #{tpu_custom_call.1} parent=1 // pred_fallthru
      _
    // Predicated region
    $region50: #{tpu_custom_call.1} parent=1 // pred_check
      _
    $region51: #{tpu_custom_call.1} parent=1 // pred_check_branch
      %571 = sbr.rel (0) target = $region53
    $region52: #{tpu_custom_call.1} parent=1 // pred_region
      %572 = dma.done [#allocation4], 256
    $region53: #{tpu_custom_call.1} parent=1 // pred_fallthru
      _
    %573 = vsyncpa [#allocation3], 1
    %574 = vsyncpa [#allocation6], 1
    %575 = vsyncpa [#allocation9], 1
    %576 = vsyncpa [#allocation4], 1

</llo_original>
